<compile_context>
chip_gen: v7x
topology: tpu7x:2x2x1
jax: 0.10.0
libtpu: 0.0.40
codegen_flags: <defaults>
</compile_context>

<pallas_src>
import functools

import jax
import jax.numpy as jnp
from jax.experimental import pallas as pl
from jax.experimental.pallas import tpu as pltpu


def _round_up(x, m):
    return (x + m - 1) // m * m


def _default_block_k_target():
    """Per-generation K-tile target (queue is bf16, D=128 rows per column)."""
    try:
        kind = jax.devices()[0].device_kind.lower()
    except Exception:
        return 8192
    if "v5 lite" in kind or "v5e" in kind or "v5lite" in kind:
        return 8192          # ~0.82 TB/s HBM: bigger tiles buy nothing
    return 16384             # v6e / v7x: keep the faster HBM stream saturated


def _choose_block_k(K, target):
    """Largest multiple-of-128 divisor of K not exceeding `target` (or K itself)."""
    if K <= target:
        return K
    bk = target - (target % 128)
    while bk >= 128:
        if K % bk == 0:
            return bk
        bk -= 128
    return K


def _fused_infonce_kernel(q_ref, k_ref, queue_ref, out_ref,
                          qn_scr, lpos_scr, s_scr, *,
                          inv_t, n_point, n_img):
    """Fused point + image InfoNCE, fixed-max logsumexp over K tiles.

    q_ref, k_ref : (N_pad, D) f32   query / key features (rows >= n_point+n_img
                                     are zero padding, masked in _finalize).
    queue_ref    : (D, TK)   bf16   pre-normalized negative-bank tile.
    out_ref      : (1, 128)  f32    lane 0 = sum of point losses,
                                    lane 1 = sum of image (moco) losses.
    scratch      : qn_scr (N_pad, D) bf16, lpos/s (N_pad, 1) f32.
    """
    kk = pl.program_id(0)
    n_pad = q_ref.shape[0]

    @pl.when(kk == 0)
    def _init():
        q = q_ref[...].astype(jnp.float32)
        k = k_ref[...].astype(jnp.float32)
        q_inv = jax.lax.rsqrt(jnp.sum(q * q, axis=-1, keepdims=True) + 1e-12)
        k_inv = jax.lax.rsqrt(jnp.sum(k * k, axis=-1, keepdims=True) + 1e-12)
        # normalized queries, cached in bf16 for the MXU across all K tiles
        qn_scr[...] = (q * q_inv).astype(jnp.bfloat16)
        # positive logit without materializing kn
        l_pos = jnp.sum(q * k, axis=-1, keepdims=True) * q_inv * k_inv * inv_t
        lpos_scr[...] = l_pos
        # Fixed-max logsumexp: every logit (pos or neg) is <= 1/T because all
        # vectors are L2-normalized, so seed the running sum-of-exponentials
        # with exp(l_pos - 1/T).  No online max, no cross-tile serial dep.
        s_scr[...] = jnp.exp(l_pos - inv_t)

    # negative logits for this K tile (bf16 x bf16 on the MXU, f32 accumulate)
    l_neg = jnp.dot(qn_scr[...], queue_ref[...],
                    preferred_element_type=jnp.float32) * inv_t
    s_scr[...] += jnp.sum(jnp.exp(l_neg - inv_t), axis=-1, keepdims=True)

    @pl.when(kk == pl.num_programs(0) - 1)
    def _finalize():
        # per-row loss = logsumexp([l_pos, l_neg_all]) - l_pos
        loss = inv_t + jnp.log(s_scr[...]) - lpos_scr[...]   # (N_pad, 1)
        row = jax.lax.broadcasted_iota(jnp.int32, (n_pad, 1), 0)
        sum_point = jnp.sum(jnp.where(row < n_point, loss, 0.0))
        sum_img = jnp.sum(
            jnp.where((row >= n_point) & (row < n_point + n_img), loss, 0.0))
        lane = jax.lax.broadcasted_iota(jnp.int32, (1, 128), 1)
        out_ref[...] = jnp.where(
            lane == 0, sum_point, jnp.where(lane == 1, sum_img, 0.0))


def fused_infonce_sums(q_all, k_all, queue_n_bf16, n_point, n_img,
                       temperature=0.2, block_k=None):
    """q_all, k_all: (N_pad, D) f32; queue_n_bf16: (D, K) pre-normalized bf16.

    Returns (sum_of_point_losses, sum_of_image_losses) as f32 scalars.
    """
    n_pad, d = q_all.shape
    d2, K = queue_n_bf16.shape
    assert d == d2
    if block_k is None:
        block_k = _choose_block_k(K, _default_block_k_target())
    block_k = min(block_k, K)
    assert K % block_k == 0 and block_k % 128 == 0, (K, block_k)
    num_k = K // block_k

    kernel = functools.partial(_fused_infonce_kernel,
                               inv_t=1.0 / temperature,
                               n_point=n_point, n_img=n_img)

    # Deeper queue pipelining only pays off on long grids; skip it on short
    # ones (also keeps the demo path on the default 2-deep pipeline).
    queue_buffers = 3 if num_k >= 3 else 2
    if queue_buffers > 2:
        queue_spec = pl.BlockSpec((d, block_k), lambda kk: (0, kk),
                                  pipeline_mode=pl.Buffered(queue_buffers))
    else:
        queue_spec = pl.BlockSpec((d, block_k), lambda kk: (0, kk))

    # Explicit VMEM budget: queue tiles (multi-buffered) + f32 l_neg/exp temps
    # + resident q/k + scratch, with headroom; capped at 48 MiB for v7x.
    vmem_need = (queue_buffers * d * block_k * 2
                 + 2 * n_pad * block_k * 4
                 + 4 * n_pad * d * 4
                 + n_pad * d * 2 + 2 * n_pad * 4
                 + (4 << 20))
    vmem_limit = int(min(max(vmem_need, 32 << 20), 48 << 20))

    cost = pl.CostEstimate(
        flops=2 * n_pad * d * K + 6 * n_pad * d,
        transcendentals=n_pad * (K + 3),
        bytes_accessed=2 * n_pad * d * 4 + d * K * 2 + 128 * 4)

    out = pl.pallas_call(
        kernel,
        out_shape=jax.ShapeDtypeStruct((1, 128), jnp.float32),
        grid_spec=pltpu.PrefetchScalarGridSpec(
            num_scalar_prefetch=0,
            grid=(num_k,),
            in_specs=[
                pl.BlockSpec((n_pad, d), lambda kk: (0, 0)),      # q (resident)
                pl.BlockSpec((n_pad, d), lambda kk: (0, 0)),      # k (resident)
                queue_spec,                                       # queue tiles
            ],
            out_specs=pl.BlockSpec((1, 128), lambda kk: (0, 0)),
            scratch_shapes=[
                pltpu.VMEM((n_pad, d), jnp.bfloat16),   # cached normalized q
                pltpu.VMEM((n_pad, 1), jnp.float32),    # l_pos
                pltpu.VMEM((n_pad, 1), jnp.float32),    # running sum-exp
            ]),
        compiler_params=pltpu.CompilerParams(
            dimension_semantics=("arbitrary",),          # K is a reduction axis
            vmem_limit_bytes=vmem_limit),
        cost_estimate=cost,
    )(q_all, k_all, queue_n_bf16)
    return out[0, 0], out[0, 1]


class GeneralLossPallas:
    """JAX mirror of PLRC General_Loss (point mode)."""

    def __init__(self, batch_size=2, world_size=1, rank=0):
        self.T = 0.2
        self.total_batch_size = batch_size
        self.world_size = world_size
        self.per_gpu_batch_size = batch_size // world_size
        self.gpu_rank = rank
        self.loss_input_dim = 128   # D
        self.keep_point = 16        # points per image
        self.queue_len = 256        # synthetic negative bank size
        self.block_k = None         # auto: whole queue if small, else per-chip

        # Deterministic synthetic negative queue (stands in for the MoCo queue
        # buffer the real module reads from the encoder wrapper).
        kq = jax.random.PRNGKey(1234)
        self.queue = jax.random.normal(
            kq, (self.loss_input_dim, self.queue_len), dtype=jnp.float32)
        # Pre-normalize ONCE (hoisted out of the kernel) and store bf16 in HBM.
        q_inv = jax.lax.rsqrt(
            jnp.sum(self.queue * self.queue, axis=0, keepdims=True) + 1e-12)
        self.queue_n_bf16 = (self.queue * q_inv).astype(jnp.bfloat16)

    def forward(self, fxs, fxs_pre, fxs_hist, fxs_hist_pre, ids=None,
                gxs=None, pxs=None, rxs=None, is_train=True, cur_epoch=0,
                mode='point', len_obj=None):
        assert mode == 'point'
        B, P, D = fxs.shape
        n_point = B * P          # point-level rows
        n_img = B                # image-level (moco) rows
        n_total = n_point + n_img
        n_pad = _round_up(n_total, 16)   # sublane-friendly for bf16 scratch

        # Fuse the two contrastive problems along N so the queue is loaded
        # once and a single pallas_call is dispatched.  concatenate + pad is
        # cheaper than four dynamic-update-slices at this scale.
        q_cat = jnp.concatenate(
            [fxs.reshape(n_point, D), fxs_pre.reshape(n_img, D)], axis=0)
        k_cat = jnp.concatenate(
            [fxs_hist.reshape(n_point, D), fxs_hist_pre.reshape(n_img, D)],
            axis=0)
        pad = n_pad - n_total
        q_all = jnp.pad(q_cat, ((0, pad), (0, 0)))
        k_all = jnp.pad(k_cat, ((0, pad), (0, 0)))

        sum_point, sum_moco = fused_infonce_sums(
            q_all, k_all, self.queue_n_bf16, n_point, n_img,
            temperature=self.T, block_k=self.block_k)

        loss_point = sum_point / n_point
        loss_moco = sum_moco / n_img

        zero = jnp.zeros((1,), dtype=jnp.float32)
        losses_point = [loss_point, zero, zero]   # forward() appends 2 zeros
        losses_moco = [loss_moco, zero, zero]
        to_vis = None
        return losses_point, losses_moco, to_vis


def _reference_infonce(q, k, queue, t):
    qn = q / jnp.sqrt(jnp.sum(q * q, -1, keepdims=True) + 1e-12)
    kn = k / jnp.sqrt(jnp.sum(k * k, -1, keepdims=True) + 1e-12)
    qun = queue / jnp.sqrt(jnp.sum(queue * queue, 0, keepdims=True) + 1e-12)
    l_pos = jnp.sum(qn * kn, -1, keepdims=True)
    l_neg = qn @ qun
    logits = jnp.concatenate([l_pos, l_neg], axis=1) / t
    return jnp.mean(jax.nn.logsumexp(logits, axis=1) - logits[:, 0])


if __name__ == "__main__":
    key = jax.random.PRNGKey(0)
    B, P, D = 2, 16, 128   # batch, keep_point, loss_input_dim
    k1, k2, k3, k4 = jax.random.split(key, 4)
    fxs = jax.random.normal(k1, (B, P, D), dtype=jnp.float32)       # query pts
    fxs_hist = jax.random.normal(k2, (B, P, D), dtype=jnp.float32)  # key pts
    fxs_pre = jax.random.normal(k3, (B, 1, D), dtype=jnp.float32)   # pooled q
    fxs_hist_pre = jax.random.normal(k4, (B, 1, D), dtype=jnp.float32)  # pooled k

    loss_mod = GeneralLossPallas(batch_size=B)
    losses_point, losses_moco, to_vis = loss_mod.forward(
        fxs, fxs_pre, fxs_hist, fxs_hist_pre, mode='point')

    lp = jax.block_until_ready(losses_point[0])
    lm = jax.block_until_ready(losses_moco[0])

    # sanity check against pure-JAX f32 reference (kernel uses bf16 on the
    # MXU for the negative logits, so tolerances are loosened accordingly).
    ref_p = _reference_infonce(fxs.reshape(B * P, D),
                               fxs_hist.reshape(B * P, D),
                               loss_mod.queue, loss_mod.T)
    ref_m = _reference_infonce(fxs_pre.reshape(B, D),
                               fxs_hist_pre.reshape(B, D),
                               loss_mod.queue, loss_mod.T)
    assert jnp.allclose(lp, ref_p, atol=3e-2, rtol=3e-2), (lp, ref_p)
    assert jnp.allclose(lm, ref_m, atol=3e-2, rtol=3e-2), (lm, ref_m)
    assert losses_point[1].shape == (1,) and losses_moco[2].shape == (1,)

    print("KERNEL_OK")
</pallas_src>

<mosaic_0001>
module attributes {stable_mosaic.version = 11 : i64} {
  func.func @_fused_infonce_kernel(%arg0: i32, %arg1: memref<48x128xf32, #tpu.memory_space<vmem>>, %arg2: memref<48x128xf32, #tpu.memory_space<vmem>>, %arg3: memref<128x256xbf16, #tpu.memory_space<vmem>>, %arg4: memref<1x128xf32, #tpu.memory_space<vmem>>, %arg5: memref<48x128xbf16, #tpu.memory_space<vmem>>, %arg6: memref<48x1xf32, #tpu.memory_space<vmem>>, %arg7: memref<48x1xf32, #tpu.memory_space<vmem>>) attributes {dimension_semantics = [#tpu.dimension_semantics<arbitrary>], iteration_bounds = array<i64: 1>, scalar_prefetch = 0 : i64, scratch_operands = 3 : i64, tpu.core_type = #tpu.core_type<tc>, window_params = [{pipeline_mode = #tpu.pipeline_mode<synchronous>, transform_indices = @transform_0, window_bounds = array<i64: 48, 128>}, {pipeline_mode = #tpu.pipeline_mode<synchronous>, transform_indices = @transform_1, window_bounds = array<i64: 48, 128>}, {transform_indices = @transform_2, window_bounds = array<i64: 128, 256>}, {pipeline_mode = #tpu.pipeline_mode<synchronous>, transform_indices = @transform_3, window_bounds = array<i64: 1, 128>}]} {
    %c0_i32 = arith.constant 0 : i32
    %0 = arith.cmpi eq, %arg0, %c0_i32 : i32
    %1 = arith.extui %0 : i1 to i32
    %c0_i32_0 = arith.constant 0 : i32
    %2 = arith.cmpi ne, %1, %c0_i32_0 : i32
    scf.if %2 {
      %c0_13 = arith.constant 0 : index
      %c0_14 = arith.constant 0 : index
      %19 = vector.load %arg1[%c0_13, %c0_14] : memref<48x128xf32, #tpu.memory_space<vmem>>, vector<48x128xf32>
      %c0_15 = arith.constant 0 : index
      %c0_16 = arith.constant 0 : index
      %20 = vector.load %arg2[%c0_15, %c0_16] : memref<48x128xf32, #tpu.memory_space<vmem>>, vector<48x128xf32>
      %21 = arith.mulf %19, %19 : vector<48x128xf32>
      %cst_17 = arith.constant dense<0.000000e+00> : vector<48xf32>
      %22 = vector.multi_reduction <add>, %21, %cst_17 [1] : vector<48x128xf32> to vector<48xf32>
      %23 = vector.shape_cast %22 : vector<48xf32> to vector<48x1xf32>
      %cst_18 = arith.constant 9.99999996E-13 : f32
      %24 = vector.broadcast %cst_18 : f32 to vector<48x1xf32>
      %25 = arith.addf %23, %24 : vector<48x1xf32>
      %26 = math.rsqrt %25 : vector<48x1xf32>
      %27 = arith.mulf %20, %20 : vector<48x128xf32>
      %cst_19 = arith.constant dense<0.000000e+00> : vector<48xf32>
      %28 = vector.multi_reduction <add>, %27, %cst_19 [1] : vector<48x128xf32> to vector<48xf32>
      %29 = vector.shape_cast %28 : vector<48xf32> to vector<48x1xf32>
      %cst_20 = arith.constant 9.99999996E-13 : f32
      %30 = vector.broadcast %cst_20 : f32 to vector<48x1xf32>
      %31 = arith.addf %29, %30 : vector<48x1xf32>
      %32 = math.rsqrt %31 : vector<48x1xf32>
      %33 = vector.broadcast %26 : vector<48x1xf32> to vector<48x128xf32>
      %34 = arith.mulf %19, %33 : vector<48x128xf32>
      %35 = arith.truncf %34 : vector<48x128xf32> to vector<48x128xbf16>
      %c0_21 = arith.constant 0 : index
      %c0_22 = arith.constant 0 : index
      %36 = vector.load %arg5[%c0_21, %c0_22] : memref<48x128xbf16, #tpu.memory_space<vmem>>, vector<48x128xbf16>
      tpu.vector_store %arg5[%c0_21, %c0_22], %35 {strides = array<i32>} : memref<48x128xbf16, #tpu.memory_space<vmem>>, vector<48x128xbf16>,
      %37 = arith.mulf %19, %20 : vector<48x128xf32>
      %cst_23 = arith.constant dense<0.000000e+00> : vector<48xf32>
      %38 = vector.multi_reduction <add>, %37, %cst_23 [1] : vector<48x128xf32> to vector<48xf32>
      %39 = vector.shape_cast %38 : vector<48xf32> to vector<48x1xf32>
      %40 = arith.mulf %39, %26 : vector<48x1xf32>
      %41 = arith.mulf %40, %32 : vector<48x1xf32>
      %cst_24 = arith.constant 5.000000e+00 : f32
      %42 = vector.broadcast %cst_24 : f32 to vector<48x1xf32>
      %43 = arith.mulf %41, %42 : vector<48x1xf32>
      %c0_25 = arith.constant 0 : index
      %c0_26 = arith.constant 0 : index
      %44 = vector.load %arg6[%c0_25, %c0_26] : memref<48x1xf32, #tpu.memory_space<vmem>>, vector<48x1xf32>
      tpu.vector_store %arg6[%c0_25, %c0_26], %43 {strides = array<i32>} : memref<48x1xf32, #tpu.memory_space<vmem>>, vector<48x1xf32>,
      %cst_27 = arith.constant 5.000000e+00 : f32
      %45 = vector.broadcast %cst_27 : f32 to vector<48x1xf32>
      %46 = arith.subf %43, %45 : vector<48x1xf32>
      %47 = math.exp %46 : vector<48x1xf32>
      %c0_28 = arith.constant 0 : index
      %c0_29 = arith.constant 0 : index
      %48 = vector.load %arg7[%c0_28, %c0_29] : memref<48x1xf32, #tpu.memory_space<vmem>>, vector<48x1xf32>
      tpu.vector_store %arg7[%c0_28, %c0_29], %47 {strides = array<i32>} : memref<48x1xf32, #tpu.memory_space<vmem>>, vector<48x1xf32>,
    } else {
    }
    %c0 = arith.constant 0 : index
    %c0_1 = arith.constant 0 : index
    %3 = vector.load %arg5[%c0, %c0_1] : memref<48x128xbf16, #tpu.memory_space<vmem>>, vector<48x128xbf16>
    %c0_2 = arith.constant 0 : index
    %c0_3 = arith.constant 0 : index
    %4 = vector.load %arg3[%c0_2, %c0_3] : memref<128x256xbf16, #tpu.memory_space<vmem>>, vector<128x256xbf16>
    %cst = arith.constant dense<0.000000e+00> : vector<48x256xf32>
    %5 = tpu.matmul %3, %4, %cst {dimension_numbers = #tpu.dot_dimension_numbers<[1], [0], [0], [1], [0, 0, 1, 1], [], []>} : vector<48x128xbf16>, vector<128x256xbf16>, vector<48x256xf32> -> vector<48x256xf32>
    %cst_4 = arith.constant 5.000000e+00 : f32
    %6 = vector.broadcast %cst_4 : f32 to vector<48x256xf32>
    %7 = arith.mulf %5, %6 : vector<48x256xf32>
    %c0_5 = arith.constant 0 : index
    %c0_6 = arith.constant 0 : index
    %8 = vector.load %arg7[%c0_5, %c0_6] : memref<48x1xf32, #tpu.memory_space<vmem>>, vector<48x1xf32>
    %cst_7 = arith.constant 5.000000e+00 : f32
    %9 = vector.broadcast %cst_7 : f32 to vector<48x256xf32>
    %10 = arith.subf %7, %9 : vector<48x256xf32>
    %11 = math.exp %10 : vector<48x256xf32>
    %cst_8 = arith.constant dense<0.000000e+00> : vector<48xf32>
    %12 = vector.multi_reduction <add>, %11, %cst_8 [1] : vector<48x256xf32> to vector<48xf32>
    %13 = vector.shape_cast %12 : vector<48xf32> to vector<48x1xf32>
    %14 = arith.addf %8, %13 : vector<48x1xf32>
    %c0_9 = arith.constant 0 : index
    %c0_10 = arith.constant 0 : index
    %15 = vector.load %arg7[%c0_9, %c0_10] : memref<48x1xf32, #tpu.memory_space<vmem>>, vector<48x1xf32>
    tpu.vector_store %arg7[%c0_9, %c0_10], %14 {strides = array<i32>} : memref<48x1xf32, #tpu.memory_space<vmem>>, vector<48x1xf32>,
    %c0_i32_11 = arith.constant 0 : i32
    %16 = arith.cmpi eq, %arg0, %c0_i32_11 : i32
    %17 = arith.extui %16 : i1 to i32
    %c0_i32_12 = arith.constant 0 : i32
    %18 = arith.cmpi ne, %17, %c0_i32_12 : i32
    scf.if %18 {
      %c0_13 = arith.constant 0 : index
      %c0_14 = arith.constant 0 : index
      %19 = vector.load %arg7[%c0_13, %c0_14] : memref<48x1xf32, #tpu.memory_space<vmem>>, vector<48x1xf32>
      %20 = math.log %19 : vector<48x1xf32>
      %cst_15 = arith.constant 5.000000e+00 : f32
      %21 = vector.broadcast %cst_15 : f32 to vector<48x1xf32>
      %22 = arith.addf %21, %20 : vector<48x1xf32>
      %c0_16 = arith.constant 0 : index
      %c0_17 = arith.constant 0 : index
      %23 = vector.load %arg6[%c0_16, %c0_17] : memref<48x1xf32, #tpu.memory_space<vmem>>, vector<48x1xf32>
      %24 = arith.subf %22, %23 : vector<48x1xf32>
      %25 = tpu.iota {dimensions = array<i32: 0>} : vector<48x1xi32>
      %c32_i32 = arith.constant 32 : i32
      %26 = vector.broadcast %c32_i32 : i32 to vector<48x1xi32>
      %27 = arith.cmpi slt, %25, %26 : vector<48x1xi32>
      %cst_18 = arith.constant 0.000000e+00 : f32
      %28 = vector.broadcast %cst_18 : f32 to vector<48x1xf32>
      %29 = arith.select %27, %24, %28 : vector<48x1xi1>, vector<48x1xf32>
      %30 = vector.shape_cast %29 : vector<48x1xf32> to vector<1x48x1xf32>
      %cst_19 = arith.constant dense<0.000000e+00> : vector<1xf32>
      %31 = vector.multi_reduction <add>, %30, %cst_19 [1, 2] : vector<1x48x1xf32> to vector<1xf32>
      %32 = vector.shape_cast %31 : vector<1xf32> to vector<1x1x1xf32>
      %33 = vector.extract %32[0, 0, 0] : f32 from vector<1x1x1xf32>
      %c32_i32_20 = arith.constant 32 : i32
      %34 = vector.broadcast %c32_i32_20 : i32 to vector<48x1xi32>
      %35 = arith.cmpi sge, %25, %34 : vector<48x1xi32>
      %c34_i32 = arith.constant 34 : i32
      %36 = vector.broadcast %c34_i32 : i32 to vector<48x1xi32>
      %37 = arith.cmpi slt, %25, %36 : vector<48x1xi32>
      %38 = arith.andi %35, %37 : vector<48x1xi1>
      %cst_21 = arith.constant 0.000000e+00 : f32
      %39 = vector.broadcast %cst_21 : f32 to vector<48x1xf32>
      %40 = arith.select %38, %24, %39 : vector<48x1xi1>, vector<48x1xf32>
      %41 = vector.shape_cast %40 : vector<48x1xf32> to vector<1x48x1xf32>
      %cst_22 = arith.constant dense<0.000000e+00> : vector<1xf32>
      %42 = vector.multi_reduction <add>, %41, %cst_22 [1, 2] : vector<1x48x1xf32> to vector<1xf32>
      %43 = vector.shape_cast %42 : vector<1xf32> to vector<1x1x1xf32>
      %44 = vector.extract %43[0, 0, 0] : f32 from vector<1x1x1xf32>
      %45 = tpu.iota {dimensions = array<i32: 1>} : vector<1x128xi32>
      %c0_i32_23 = arith.constant 0 : i32
      %46 = vector.broadcast %c0_i32_23 : i32 to vector<1x128xi32>
      %47 = arith.cmpi eq, %45, %46 : vector<1x128xi32>
      %c1_i32 = arith.constant 1 : i32
      %48 = vector.broadcast %c1_i32 : i32 to vector<1x128xi32>
      %49 = arith.cmpi eq, %45, %48 : vector<1x128xi32>
      %cst_24 = arith.constant 0.000000e+00 : f32
      %50 = vector.broadcast %44 : f32 to vector<1x128xf32>
      %51 = vector.broadcast %cst_24 : f32 to vector<1x128xf32>
      %52 = arith.select %49, %50, %51 : vector<1x128xi1>, vector<1x128xf32>
      %53 = vector.broadcast %33 : f32 to vector<1x128xf32>
      %54 = arith.select %47, %53, %52 : vector<1x128xi1>, vector<1x128xf32>
      %c0_25 = arith.constant 0 : index
      %c0_26 = arith.constant 0 : index
      %55 = vector.load %arg4[%c0_25, %c0_26] : memref<1x128xf32, #tpu.memory_space<vmem>>, vector<1x128xf32>
      tpu.vector_store %arg4[%c0_25, %c0_26], %54 {strides = array<i32>} : memref<1x128xf32, #tpu.memory_space<vmem>>, vector<1x128xf32>,
    } else {
    }
    return
  }
  func.func @transform_0(%arg0: i32) -> (i32, i32) {
    %c0_i32 = arith.constant 0 : i32
    %c0_i32_0 = arith.constant 0 : i32
    %c0_i32_1 = arith.constant 0 : i32
    return %c0_i32, %c0_i32_0 : i32, i32
  }
  func.func @transform_1(%arg0: i32) -> (i32, i32) {
    %c0_i32 = arith.constant 0 : i32
    %c0_i32_0 = arith.constant 0 : i32
    %c0_i32_1 = arith.constant 0 : i32
    return %c0_i32, %c0_i32_0 : i32, i32
  }
  func.func @transform_2(%arg0: i32) -> (i32, i32) {
    %c0_i32 = arith.constant 0 : i32
    %c0_i32_0 = arith.constant 0 : i32
    return %c0_i32, %arg0 : i32, i32
  }
  func.func @transform_3(%arg0: i32) -> (i32, i32) {
    %c0_i32 = arith.constant 0 : i32
    %c0_i32_0 = arith.constant 0 : i32
    %c0_i32_1 = arith.constant 0 : i32
    return %c0_i32, %c0_i32_0 : i32, i32
  }
}

</mosaic_0001>

<llo_original>
// kernel: tpu_custom_call.1
$region0: #{tpu_custom_call.1}
  #allocation0 [shape = 'u32[]', space=smem, size = 0x4, offset = 0x4, fixed_abs, tag = 'smem constant byte address 0x4 - core index']
  #allocation1 [shape = 'u32[144,128]{1,0:T(1,128)}', space=vmem, size = 0x12000, scoped, tag = 'internal scratch']
  #allocation2 [shape = 'bf16[48,128]{1,0:T(16,128)(2,1)}', space=vmem, size = 0x3000, scoped, tag = 'scratch operand']
  #allocation3 [shape = 'f32[48,1]{1,0:T(8,128)}', space=vmem, size = 0x6000, scoped, tag = 'scratch operand']
  #allocation4 [shape = 'f32[48,1]{1,0:T(8,128)}', space=vmem, size = 0x6000, scoped, tag = 'scratch operand']
  %s0 = inlined_call_operand.hbm [shape: f32[48,128], index: 0, kind: input, shape index: {}]
  %s1 = inlined_call_operand.hbm [shape: f32[48,128], index: 1, kind: input, shape index: {}]
  %s2 = inlined_call_operand.hbm [shape: bf16[128,256], index: 2, kind: input, shape index: {}]
  %s3 = inlined_call_operand.hbm [shape: f32[1,128], index: 3, kind: output, shape index: {}]
  %s4 = sld [smem:[#allocation0]]
  $region42: #{tpu_custom_call.1} parent=0
    _
  %s6 = ssub.s32 1, %s4
  %s7 = scalar_select 0, %s6, %s4
  $region1: #{tpu_custom_call.1} parent=0
    #allocation5 [shape = 'u8[24576]{0}', space=vmem, size = 0x6000, scoped, tag = 'input window, operand 0, single buffered']
    #allocation6 [shape = 's32[1]{0}', space=sflag, size = 0x4, scoped, tag = 'scoped memory for tpu_custom_call.1']
    #allocation7 [shape = 's32[1]{0}', space=sflag, size = 0x4, scoped, tag = 'scoped memory for tpu_custom_call.1']
    #allocation8 [shape = 'u8[24576]{0}', space=vmem, size = 0x6000, scoped, tag = 'input window, operand 1, single buffered']
    #allocation9 [shape = 's32[1]{0}', space=sflag, size = 0x4, scoped, tag = 'scoped memory for tpu_custom_call.1']
    #allocation10 [shape = 'u8[65536]{0}', space=vmem, size = 0x10000, scoped, tag = 'input window, operand 2, single buffered']
    #allocation11 [shape = 'u8[512]{0}', space=vmem, size = 0x400, scoped, tag = 'output window, operand 0, single buffered']
    %8 = vsyncpa [#allocation6], 0
    %9 = vsyncpa [#allocation9], 0
    %10 = vsyncpa [#allocation7], 0
    // Predicated region
    $region2: #{tpu_custom_call.1} parent=1 // pred_check
      _
    $region3: #{tpu_custom_call.1} parent=1 // pred_check_branch
      %12 = sbr.rel (0) target = $region5
    $region4: #{tpu_custom_call.1} parent=1 // pred_region
      %s14 = ssub.s32 768, 768
      %15 = vsyncadd [#allocation6], %s14
      %s16 = sshll.u32 [#allocation5], 4
      %s17 = int_to_ptr.vmem [resolvable:$true] %s16
      %22 = dma.hbm_to_vmem [thread:$0]  %s0, 768, %s17, [#allocation6], 128, 128, 8
    $region5: #{tpu_custom_call.1} parent=1 // pred_fallthru
      _
    // Predicated region
    $region6: #{tpu_custom_call.1} parent=1 // pred_check
      _
    $region7: #{tpu_custom_call.1} parent=1 // pred_check_branch
      %24 = sbr.rel (0) target = $region9
    $region8: #{tpu_custom_call.1} parent=1 // pred_region
      %s26 = ssub.s32 768, 768
      %27 = vsyncadd [#allocation9], %s26
      %s28 = sshll.u32 [#allocation8], 4
      %s29 = int_to_ptr.vmem [resolvable:$true] %s28
      %34 = dma.hbm_to_vmem [thread:$0]  %s1, 768, %s29, [#allocation9], 128, 128, 8
    $region9: #{tpu_custom_call.1} parent=1 // pred_fallthru
      _
    // Predicated region
    $region10: #{tpu_custom_call.1} parent=1 // pred_check
      _
    $region11: #{tpu_custom_call.1} parent=1 // pred_check_branch
      %36 = sbr.rel (0) target = $region13
    $region12: #{tpu_custom_call.1} parent=1 // pred_region
      %s38 = ssub.s32 2048, 2048
      %39 = vsyncadd [#allocation9], %s38
      %s40 = sshll.u32 [#allocation10], 4
      %s41 = int_to_ptr.vmem [resolvable:$true] %s40
      %46 = dma.hbm_to_vmem [thread:$0]  %s2, 2048, %s41, [#allocation9], 128, 128, 8
    $region13: #{tpu_custom_call.1} parent=1 // pred_fallthru
      _
    // Predicated region
    $region14: #{tpu_custom_call.1} parent=1 // pred_check
      _
    $region15: #{tpu_custom_call.1} parent=1 // pred_check_branch
      %48 = sbr.rel (0) target = $region17
    $region16: #{tpu_custom_call.1} parent=1 // pred_region
      %49 = dma.done [#allocation6], 768
    $region17: #{tpu_custom_call.1} parent=1 // pred_fallthru
      _
    // Predicated region
    $region18: #{tpu_custom_call.1} parent=1 // pred_check
      _
    $region19: #{tpu_custom_call.1} parent=1 // pred_check_branch
      %51 = sbr.rel (0) target = $region21
    $region20: #{tpu_custom_call.1} parent=1 // pred_region
      %52 = dma.done [#allocation9], 768
    $region21: #{tpu_custom_call.1} parent=1 // pred_fallthru
      _
    // Predicated region
    $region22: #{tpu_custom_call.1} parent=1 // pred_check
      _
    $region23: #{tpu_custom_call.1} parent=1 // pred_check_branch
      %54 = sbr.rel (0) target = $region25
    $region24: #{tpu_custom_call.1} parent=1 // pred_region
      %55 = dma.done [#allocation9], 2048
    $region25: #{tpu_custom_call.1} parent=1 // pred_fallthru
      _
    %p57 = scmp.eq.s32.totalorder 0, 0
    // Predicated region
    $region26: #{tpu_custom_call.1} parent=1 // pred_check
      %p58 = pneg %p57
    $region27: #{tpu_custom_call.1} parent=1 // pred_check_branch
      %60 = sbr.rel (%p58) target = $region29
    $region28: #{tpu_custom_call.1} parent=1 // pred_region
      %v61 = vld [vmem:[#allocation5] sm:$0xff]
      %v62 = vld [vmem:[#allocation5 + $0x8] sm:$0xff]
      %v63 = vld [vmem:[#allocation5 + $0x10] sm:$0xff]
      %v64 = vld [vmem:[#allocation5 + $0x18] sm:$0xff]
      %v65 = vld [vmem:[#allocation5 + $0x20] sm:$0xff]
      %v66 = vld [vmem:[#allocation5 + $0x28] sm:$0xff]
      %v67 = vld [vmem:[#allocation8] sm:$0xff]
      %v68 = vld [vmem:[#allocation8 + $0x8] sm:$0xff]
      %v69 = vld [vmem:[#allocation8 + $0x10] sm:$0xff]
      %v70 = vld [vmem:[#allocation8 + $0x18] sm:$0xff]
      %v71 = vld [vmem:[#allocation8 + $0x20] sm:$0xff]
      %v72 = vld [vmem:[#allocation8 + $0x28] sm:$0xff]
      %v73 = vmul.f32 %v61, %v61
      %v74 = vmul.f32 %v62, %v62
      %v75 = vmul.f32 %v63, %v63
      %v76 = vmul.f32 %v64, %v64
      %v77 = vmul.f32 %v65, %v65
      %v78 = vmul.f32 %v66, %v66
      %79 = vadd.xlane.f32.xlu0 %v73
      %v80 = vpop.xlane.xlu0 %79
      %81 = vadd.xlane.f32.xlu0 %v74
      %v82 = vpop.xlane.xlu0 %81
      %83 = vadd.xlane.f32.xlu0 %v75
      %v84 = vpop.xlane.xlu0 %83
      %85 = vadd.xlane.f32.xlu0 %v76
      %v86 = vpop.xlane.xlu0 %85
      %87 = vadd.xlane.f32.xlu0 %v77
      %v88 = vpop.xlane.xlu0 %87
      %89 = vadd.xlane.f32.xlu0 %v78
      %v90 = vpop.xlane.xlu0 %89
      %v91 = vadd.f32 %v80, 1e-12
      %v92 = vadd.f32 %v82, 1e-12
      %v93 = vadd.f32 %v84, 1e-12
      %v94 = vadd.f32 %v86, 1e-12
      %v95 = vadd.f32 %v88, 1e-12
      %v96 = vadd.f32 %v90, 1e-12
      %v97 = vrsqrt.pop %v91
      %v98 = vrsqrt.pop %v92
      %v99 = vrsqrt.pop %v93
      %v100 = vrsqrt.pop %v94
      %v101 = vrsqrt.pop %v95
      %v102 = vrsqrt.pop %v96
      %v103 = vmul.f32 %v67, %v67
      %v104 = vmul.f32 %v68, %v68
      %v105 = vmul.f32 %v69, %v69
      %v106 = vmul.f32 %v70, %v70
      %v107 = vmul.f32 %v71, %v71
      %v108 = vmul.f32 %v72, %v72
      %109 = vadd.xlane.f32.xlu0 %v103
      %v110 = vpop.xlane.xlu0 %109
      %111 = vadd.xlane.f32.xlu0 %v104
      %v112 = vpop.xlane.xlu0 %111
      %113 = vadd.xlane.f32.xlu0 %v105
      %v114 = vpop.xlane.xlu0 %113
      %115 = vadd.xlane.f32.xlu0 %v106
      %v116 = vpop.xlane.xlu0 %115
      %117 = vadd.xlane.f32.xlu0 %v107
      %v118 = vpop.xlane.xlu0 %117
      %119 = vadd.xlane.f32.xlu0 %v108
      %v120 = vpop.xlane.xlu0 %119
      %v121 = vadd.f32 %v110, 1e-12
      %v122 = vadd.f32 %v112, 1e-12
      %v123 = vadd.f32 %v114, 1e-12
      %v124 = vadd.f32 %v116, 1e-12
      %v125 = vadd.f32 %v118, 1e-12
      %v126 = vadd.f32 %v120, 1e-12
      %v127 = vrsqrt.pop %v121
      %v128 = vrsqrt.pop %v122
      %v129 = vrsqrt.pop %v123
      %v130 = vrsqrt.pop %v124
      %v131 = vrsqrt.pop %v125
      %v132 = vrsqrt.pop %v126
      %v133 = vmul.f32 %v61, %v97
      %v134 = vmul.f32 %v62, %v98
      %v135 = vmul.f32 %v63, %v99
      %v136 = vmul.f32 %v64, %v100
      %v137 = vmul.f32 %v65, %v101
      %v138 = vmul.f32 %v66, %v102
      %v139 = vpack.c.bf16 %v134, %v133
      %v140 = vpack.c.bf16 %v136, %v135
      %v141 = vpack.c.bf16 %v138, %v137
      %142 = vst [vmem:[#allocation2] sm:$0xff] %v139
      %143 = vst [vmem:[#allocation2 + $0x8] sm:$0xff] %v140
      %144 = vst [vmem:[#allocation2 + $0x10] sm:$0xff] %v141
      %v145 = vmul.f32 %v61, %v67
      %v146 = vmul.f32 %v62, %v68
      %v147 = vmul.f32 %v63, %v69
      %v148 = vmul.f32 %v64, %v70
      %v149 = vmul.f32 %v65, %v71
      %v150 = vmul.f32 %v66, %v72
      %151 = vadd.xlane.f32.xlu0 %v145
      %v152 = vpop.xlane.xlu0 %151
      %153 = vadd.xlane.f32.xlu0 %v146
      %v154 = vpop.xlane.xlu0 %153
      %155 = vadd.xlane.f32.xlu0 %v147
      %v156 = vpop.xlane.xlu0 %155
      %157 = vadd.xlane.f32.xlu0 %v148
      %v158 = vpop.xlane.xlu0 %157
      %159 = vadd.xlane.f32.xlu0 %v149
      %v160 = vpop.xlane.xlu0 %159
      %161 = vadd.xlane.f32.xlu0 %v150
      %v162 = vpop.xlane.xlu0 %161
      %v163 = vmul.f32 %v152, %v97
      %v164 = vmul.f32 %v154, %v98
      %v165 = vmul.f32 %v156, %v99
      %v166 = vmul.f32 %v158, %v100
      %v167 = vmul.f32 %v160, %v101
      %v168 = vmul.f32 %v162, %v102
      %v169 = vmul.f32 %v163, %v127
      %v170 = vmul.f32 %v164, %v128
      %v171 = vmul.f32 %v165, %v129
      %v172 = vmul.f32 %v166, %v130
      %v173 = vmul.f32 %v167, %v131
      %v174 = vmul.f32 %v168, %v132
      %v175 = vmul.f32 %v169, 5.0
      %v176 = vmul.f32 %v170, 5.0
      %v177 = vmul.f32 %v171, 5.0
      %v178 = vmul.f32 %v172, 5.0
      %v179 = vmul.f32 %v173, 5.0
      %v180 = vmul.f32 %v174, 5.0
      %vm181 = vcmask 7168
      %182 = vst.msk [vmem:[#allocation3] sm:$0xff] %vm181, %v175
      %183 = vst.msk [vmem:[#allocation3 + $0x8] sm:$0xff] %vm181, %v176
      %184 = vst.msk [vmem:[#allocation3 + $0x10] sm:$0xff] %vm181, %v177
      %185 = vst.msk [vmem:[#allocation3 + $0x18] sm:$0xff] %vm181, %v178
      %186 = vst.msk [vmem:[#allocation3 + $0x20] sm:$0xff] %vm181, %v179
      %187 = vst.msk [vmem:[#allocation3 + $0x28] sm:$0xff] %vm181, %v180
      %v188 = vsub.f32 %v175, 5.0
      %v189 = vsub.f32 %v176, 5.0
      %v190 = vsub.f32 %v177, 5.0
      %v191 = vsub.f32 %v178, 5.0
      %v192 = vsub.f32 %v179, 5.0
      %v193 = vsub.f32 %v180, 5.0
      %v194 = vmul.f32 %v188, 1.442695
      %v195 = vpow.pop %v194
      %v196 = vmul.f32 %v189, 1.442695
      %v197 = vpow.pop %v196
      %v198 = vmul.f32 %v190, 1.442695
      %v199 = vpow.pop %v198
      %v200 = vmul.f32 %v191, 1.442695
      %v201 = vpow.pop %v200
      %v202 = vmul.f32 %v192, 1.442695
      %v203 = vpow.pop %v202
      %v204 = vmul.f32 %v193, 1.442695
      %v205 = vpow.pop %v204
      %206 = vst.msk [vmem:[#allocation4] sm:$0xff] %vm181, %v195
      %207 = vst.msk [vmem:[#allocation4 + $0x8] sm:$0xff] %vm181, %v197
      %208 = vst.msk [vmem:[#allocation4 + $0x10] sm:$0xff] %vm181, %v199
      %209 = vst.msk [vmem:[#allocation4 + $0x18] sm:$0xff] %vm181, %v201
      %210 = vst.msk [vmem:[#allocation4 + $0x20] sm:$0xff] %vm181, %v203
      %211 = vst.msk [vmem:[#allocation4 + $0x28] sm:$0xff] %vm181, %v205
    $region29: #{tpu_custom_call.1} parent=1 // pred_fallthru
      _
    %v212 = vld [vmem:[#allocation2] sm:$0xff]
    %v213 = vld [vmem:[#allocation2 + $0x8] sm:$0xff]
    %v214 = vld [vmem:[#allocation2 + $0x10] sm:$0xff]
    %v215 = vld [vmem:[#allocation10] sm:$0xff]
    %v216 = vld [vmem:[#allocation10 + $0x8] sm:$0xff]
    %v217 = vld [vmem:[#allocation10 + $0x10] sm:$0xff]
    %v218 = vld [vmem:[#allocation10 + $0x18] sm:$0xff]
    %v219 = vld [vmem:[#allocation10 + $0x20] sm:$0xff]
    %v220 = vld [vmem:[#allocation10 + $0x28] sm:$0xff]
    %v221 = vld [vmem:[#allocation10 + $0x30] sm:$0xff]
    %v222 = vld [vmem:[#allocation10 + $0x38] sm:$0xff]
    %v223 = vld [vmem:[#allocation10 + $0x40] sm:$0xff]
    %v224 = vld [vmem:[#allocation10 + $0x48] sm:$0xff]
    %v225 = vld [vmem:[#allocation10 + $0x50] sm:$0xff]
    %v226 = vld [vmem:[#allocation10 + $0x58] sm:$0xff]
    %v227 = vld [vmem:[#allocation10 + $0x60] sm:$0xff]
    %v228 = vld [vmem:[#allocation10 + $0x68] sm:$0xff]
    %v229 = vld [vmem:[#allocation10 + $0x70] sm:$0xff]
    %v230 = vld [vmem:[#allocation10 + $0x78] sm:$0xff]
    %v247 = vunpack.c.l.b16 %v215
    %v248 = vunpack.c.h.b16 %v215
    %v249 = vunpack.c.l.b16 %v216
    %v250 = vunpack.c.h.b16 %v216
    %v251 = vunpack.c.l.b16 %v217
    %v252 = vunpack.c.h.b16 %v217
    %v253 = vunpack.c.l.b16 %v218
    %v254 = vunpack.c.h.b16 %v218
    %v255 = vunpack.c.l.b16 %v219
    %v256 = vunpack.c.h.b16 %v219
    %v257 = vunpack.c.l.b16 %v220
    %v258 = vunpack.c.h.b16 %v220
    %v259 = vunpack.c.l.b16 %v221
    %v260 = vunpack.c.h.b16 %v221
    %v261 = vunpack.c.l.b16 %v222
    %v262 = vunpack.c.h.b16 %v222
    %v263 = vunpack.c.l.b16 %v223
    %v264 = vunpack.c.h.b16 %v223
    %v265 = vunpack.c.l.b16 %v224
    %v266 = vunpack.c.h.b16 %v224
    %v267 = vunpack.c.l.b16 %v225
    %v268 = vunpack.c.h.b16 %v225
    %v269 = vunpack.c.l.b16 %v226
    %v270 = vunpack.c.h.b16 %v226
    %v271 = vunpack.c.l.b16 %v227
    %v272 = vunpack.c.h.b16 %v227
    %v273 = vunpack.c.l.b16 %v228
    %v274 = vunpack.c.h.b16 %v228
    %v275 = vunpack.c.l.b16 %v229
    %v276 = vunpack.c.h.b16 %v229
    %v277 = vunpack.c.l.b16 %v230
    %v278 = vunpack.c.h.b16 %v230
    %v279 = vpack.c.b16 %v249, %v247
    %v280 = vpack.c.b16 %v250, %v248
    %v281 = vpack.c.b16 %v253, %v251
    %v282 = vpack.c.b16 %v254, %v252
    %v283 = vpack.c.b16 %v257, %v255
    %v284 = vpack.c.b16 %v258, %v256
    %v285 = vpack.c.b16 %v261, %v259
    %v286 = vpack.c.b16 %v262, %v260
    %v287 = vpack.c.b16 %v265, %v263
    %v288 = vpack.c.b16 %v266, %v264
    %v289 = vpack.c.b16 %v269, %v267
    %v290 = vpack.c.b16 %v270, %v268
    %v291 = vpack.c.b16 %v273, %v271
    %v292 = vpack.c.b16 %v274, %v272
    %v293 = vpack.c.b16 %v277, %v275
    %v294 = vpack.c.b16 %v278, %v276
    %311 = vmatprep.subr.bf16.mxu0 %v280
    %312 = vmatpush1.bf16.msra.mxu0 %v279
    %313 = vmatprep.subr.bf16.mxu0 %v282
    %314 = vmatpush1.bf16.msra.mxu0 %v281
    %315 = vmatprep.subr.bf16.mxu0 %v284
    %316 = vmatpush1.bf16.msra.mxu0 %v283
    %317 = vmatprep.subr.bf16.mxu0 %v286
    %318 = vmatpush1.bf16.msra.mxu0 %v285
    %319 = vmatprep.subr.bf16.mxu0 %v288
    %320 = vmatpush1.bf16.msra.mxu0 %v287
    %321 = vmatprep.subr.bf16.mxu0 %v290
    %322 = vmatpush1.bf16.msra.mxu0 %v289
    %323 = vmatprep.subr.bf16.mxu0 %v292
    %324 = vmatpush1.bf16.msra.mxu0 %v291
    %325 = vmatprep.subr.bf16.mxu0 %v294
    %326 = vmatpush1.bf16.msra.mxu0 %v293
    %327 = vmatprep.subr.bf16.mxu0 0
    %328 = vmatpush1.bf16.msra.mxu0 0
    %329 = vmatprep.subr.bf16.mxu0 0
    %330 = vmatpush1.bf16.msra.mxu0 0
    %331 = vmatprep.subr.bf16.mxu0 0
    %332 = vmatpush1.bf16.msra.mxu0 0
    %333 = vmatprep.subr.bf16.mxu0 0
    %334 = vmatpush1.bf16.msra.mxu0 0
    %335 = vmatprep.subr.bf16.mxu0 0
    %336 = vmatpush1.bf16.msra.mxu0 0
    %337 = vmatprep.subr.bf16.mxu0 0
    %338 = vmatpush1.bf16.msra.mxu0 0
    %339 = vmatprep.subr.bf16.mxu0 0
    %340 = vmatpush1.bf16.msra.mxu0 0
    %341 = vmatprep.subr.bf16.mxu0 0
    %342 = vmatpush1.bf16.msra.mxu0 0
    %343 = vmatprep.mubr.bf16.mxu0 0
    %344 = vmatmul.mubr.bf16.gmra.mrb[0].mxu0 %v212
    %v345 = vpop.f32.mrb[0].mxu0
    %v346 = vadd.f32 0.0, %v345
    %v347 = vpop.f32.mrb[0].mxu0
    %v348 = vadd.f32 0.0, %v347
    %v349 = vpop.f32.mrb[0].mxu0
    %v350 = vadd.f32 0.0, %v349
    %v351 = vpop.f32.mrb[0].mxu0
    %v352 = vadd.f32 0.0, %v351
    %353 = vmatprep.mubr.bf16.mxu0 0
    %354 = vmatmul.mubr.bf16.gmra.mrb[0].mxu0 %v213
    %v355 = vpop.f32.mrb[0].mxu0
    %v356 = vadd.f32 0.0, %v355
    %v357 = vpop.f32.mrb[0].mxu0
    %v358 = vadd.f32 0.0, %v357
    %v359 = vpop.f32.mrb[0].mxu0
    %v360 = vadd.f32 0.0, %v359
    %v361 = vpop.f32.mrb[0].mxu0
    %v362 = vadd.f32 0.0, %v361
    %363 = vmatprep.mubr.bf16.mxu0 0
    %364 = vmatmul.mubr.bf16.gmra.mrb[0].mxu0 %v214
    %v365 = vpop.f32.mrb[0].mxu0
    %v366 = vadd.f32 0.0, %v365
    %v367 = vpop.f32.mrb[0].mxu0
    %v368 = vadd.f32 0.0, %v367
    %v369 = vpop.f32.mrb[0].mxu0
    %v370 = vadd.f32 0.0, %v369
    %v371 = vpop.f32.mrb[0].mxu0
    %v372 = vadd.f32 0.0, %v371
    %373 = vdwg.mxu0
    %v374 = vmul.f32 %v346, 5.0
    %v375 = vmul.f32 %v348, 5.0
    %v376 = vmul.f32 %v350, 5.0
    %v377 = vmul.f32 %v352, 5.0
    %v378 = vmul.f32 %v356, 5.0
    %v379 = vmul.f32 %v358, 5.0
    %v380 = vmul.f32 %v360, 5.0
    %v381 = vmul.f32 %v362, 5.0
    %v382 = vmul.f32 %v366, 5.0
    %v383 = vmul.f32 %v368, 5.0
    %v384 = vmul.f32 %v370, 5.0
    %v385 = vmul.f32 %v372, 5.0
    %v386 = vld [vmem:[#allocation4] sm:$0xff]
    %v387 = vld [vmem:[#allocation4 + $0x8] sm:$0xff]
    %v388 = vld [vmem:[#allocation4 + $0x10] sm:$0xff]
    %v389 = vld [vmem:[#allocation4 + $0x18] sm:$0xff]
    %v390 = vld [vmem:[#allocation4 + $0x20] sm:$0xff]
    %v391 = vld [vmem:[#allocation4 + $0x28] sm:$0xff]
    %v392 = vsub.f32 %v374, 5.0
    %v393 = vsub.f32 %v375, 5.0
    %v394 = vsub.f32 %v376, 5.0
    %v395 = vsub.f32 %v377, 5.0
    %v396 = vsub.f32 %v378, 5.0
    %v397 = vsub.f32 %v379, 5.0
    %v398 = vsub.f32 %v380, 5.0
    %v399 = vsub.f32 %v381, 5.0
    %v400 = vsub.f32 %v382, 5.0
    %v401 = vsub.f32 %v383, 5.0
    %v402 = vsub.f32 %v384, 5.0
    %v403 = vsub.f32 %v385, 5.0
    %v404 = vmul.f32 %v392, 1.442695
    %v405 = vpow.pop %v404
    %v406 = vmul.f32 %v393, 1.442695
    %v407 = vpow.pop %v406
    %v408 = vmul.f32 %v394, 1.442695
    %v409 = vpow.pop %v408
    %v410 = vmul.f32 %v395, 1.442695
    %v411 = vpow.pop %v410
    %v412 = vmul.f32 %v396, 1.442695
    %v413 = vpow.pop %v412
    %v414 = vmul.f32 %v397, 1.442695
    %v415 = vpow.pop %v414
    %v416 = vmul.f32 %v398, 1.442695
    %v417 = vpow.pop %v416
    %v418 = vmul.f32 %v399, 1.442695
    %v419 = vpow.pop %v418
    %v420 = vmul.f32 %v400, 1.442695
    %v421 = vpow.pop %v420
    %v422 = vmul.f32 %v401, 1.442695
    %v423 = vpow.pop %v422
    %v424 = vmul.f32 %v402, 1.442695
    %v425 = vpow.pop %v424
    %v426 = vmul.f32 %v403, 1.442695
    %v427 = vpow.pop %v426
    %v428 = vadd.f32 %v405, %v407
    %429 = vadd.xlane.f32.xlu0 %v428
    %v430 = vpop.xlane.xlu0 %429
    %v431 = vadd.f32 %v409, %v411
    %432 = vadd.xlane.f32.xlu0 %v431
    %v433 = vpop.xlane.xlu0 %432
    %v434 = vadd.f32 %v413, %v415
    %435 = vadd.xlane.f32.xlu0 %v434
    %v436 = vpop.xlane.xlu0 %435
    %v437 = vadd.f32 %v417, %v419
    %438 = vadd.xlane.f32.xlu0 %v437
    %v439 = vpop.xlane.xlu0 %438
    %v440 = vadd.f32 %v421, %v423
    %441 = vadd.xlane.f32.xlu0 %v440
    %v442 = vpop.xlane.xlu0 %441
    %v443 = vadd.f32 %v425, %v427
    %444 = vadd.xlane.f32.xlu0 %v443
    %v445 = vpop.xlane.xlu0 %444
    %v446 = vadd.f32 %v386, %v430
    %v447 = vadd.f32 %v387, %v433
    %v448 = vadd.f32 %v388, %v436
    %v449 = vadd.f32 %v389, %v439
    %v450 = vadd.f32 %v390, %v442
    %v451 = vadd.f32 %v391, %v445
    %vm452 = vcmask 7168
    %453 = vst.msk [vmem:[#allocation4] sm:$0xff] %vm452, %v446
    %454 = vst.msk [vmem:[#allocation4 + $0x8] sm:$0xff] %vm452, %v447
    %455 = vst.msk [vmem:[#allocation4 + $0x10] sm:$0xff] %vm452, %v448
    %456 = vst.msk [vmem:[#allocation4 + $0x18] sm:$0xff] %vm452, %v449
    %457 = vst.msk [vmem:[#allocation4 + $0x20] sm:$0xff] %vm452, %v450
    %458 = vst.msk [vmem:[#allocation4 + $0x28] sm:$0xff] %vm452, %v451
    // Predicated region
    $region30: #{tpu_custom_call.1} parent=1 // pred_check
      %p459 = pneg %p57
    $region31: #{tpu_custom_call.1} parent=1 // pred_check_branch
      %461 = sbr.rel (%p459) target = $region33
    $region32: #{tpu_custom_call.1} parent=1 // pred_region
      %v462 = vld [vmem:[#allocation4] sm:$0xff]
      %v463 = vld [vmem:[#allocation4 + $0x8] sm:$0xff]
      %v464 = vld [vmem:[#allocation4 + $0x10] sm:$0xff]
      %v465 = vld [vmem:[#allocation4 + $0x18] sm:$0xff]
      %v466 = vld [vmem:[#allocation4 + $0x20] sm:$0xff]
      %v467 = vld [vmem:[#allocation4 + $0x28] sm:$0xff]
      %v468 = vlog2.pop %v462
      %v469 = vmul.f32 %v468, 0.6931472
      %v470 = vlog2.pop %v463
      %v471 = vmul.f32 %v470, 0.6931472
      %v472 = vlog2.pop %v464
      %v473 = vmul.f32 %v472, 0.6931472
      %v474 = vlog2.pop %v465
      %v475 = vmul.f32 %v474, 0.6931472
      %v476 = vlog2.pop %v466
      %v477 = vmul.f32 %v476, 0.6931472
      %v478 = vlog2.pop %v467
      %v479 = vmul.f32 %v478, 0.6931472
      %v480 = vadd.f32 %v469, 5.0
      %v481 = vadd.f32 %v471, 5.0
      %v482 = vadd.f32 %v473, 5.0
      %v483 = vadd.f32 %v475, 5.0
      %v484 = vadd.f32 %v477, 5.0
      %v485 = vadd.f32 %v479, 5.0
      %v486 = vld [vmem:[#allocation3] sm:$0xff]
      %v487 = vld [vmem:[#allocation3 + $0x8] sm:$0xff]
      %v488 = vld [vmem:[#allocation3 + $0x10] sm:$0xff]
      %v489 = vld [vmem:[#allocation3 + $0x18] sm:$0xff]
      %v490 = vld [vmem:[#allocation3 + $0x20] sm:$0xff]
      %v491 = vld [vmem:[#allocation3 + $0x28] sm:$0xff]
      %v492 = vsub.f32 %v480, %v486
      %v493 = vsub.f32 %v481, %v487
      %v494 = vsub.f32 %v482, %v488
      %v495 = vsub.f32 %v483, %v489
      %v496 = vsub.f32 %v484, %v490
      %v497 = vsub.f32 %v485, %v491
      %v498 = vlaneseq
      %v499 = vshrl.u32 %v498, 7
      %v500 = vadd.s32 %v499, 8
      %v501 = vadd.s32 %v499, 16
      %v502 = vadd.s32 %v499, 24
      %v503 = vadd.s32 %v499, 32
      %v504 = vadd.s32 %v499, 40
      %vm505 = vcmp.lt.s32.totalorder %v499, 32
      %vm506 = vcmp.lt.s32.totalorder %v500, 32
      %vm507 = vcmp.lt.s32.totalorder %v501, 32
      %vm508 = vcmp.lt.s32.totalorder %v502, 32
      %vm509 = vcmp.lt.s32.totalorder %v503, 32
      %vm510 = vcmp.lt.s32.totalorder %v504, 32
      %v511 = vsel %vm505, %v492, 0.0
      %v512 = vsel %vm506, %v493, 0.0
      %v513 = vsel %vm507, %v494, 0.0
      %v514 = vsel %vm508, %v495, 0.0
      %v515 = vsel %vm509, %v496, 0.0
      %v516 = vsel %vm510, %v497, 0.0
      %v517 = vsel %vm452, %v511, 0.0
      %v518 = vsel %vm452, %v512, 0.0
      %v519 = vadd.f32 %v517, %v518
      %v520 = vsel %vm452, %v513, 0.0
      %v521 = vadd.f32 %v519, %v520
      %v522 = vsel %vm452, %v514, 0.0
      %v523 = vadd.f32 %v521, %v522
      %v524 = vsel %vm452, %v515, 0.0
      %v525 = vadd.f32 %v523, %v524
      %v526 = vsel %vm452, %v516, 0.0
      %v527 = vadd.f32 %v525, %v526
      %528 = vadd.xlane.f32.xlu0 %v527
      %v529 = vpop.xlane.xlu0 %528
      %v530 = vrot.slane %v529, 4
      %v531 = vadd.f32 %v529, %v530
      %v532 = vrot.slane %v531, 2
      %v533 = vadd.f32 %v531, %v532
      %v534 = vrot.slane %v533, 1
      %v535 = vadd.f32 %v533, %v534
      %s536 = vtos %v535
      %vm537 = vcmp.ge.s32.totalorder %v499, 32
      %vm538 = vcmp.ge.s32.totalorder %v500, 32
      %vm539 = vcmp.ge.s32.totalorder %v501, 32
      %vm540 = vcmp.ge.s32.totalorder %v502, 32
      %vm541 = vcmp.ge.s32.totalorder %v503, 32
      %vm542 = vcmp.ge.s32.totalorder %v504, 32
      %vm543 = vcmp.lt.s32.totalorder %v499, 34
      %vm544 = vcmp.lt.s32.totalorder %v500, 34
      %vm545 = vcmp.lt.s32.totalorder %v501, 34
      %vm546 = vcmp.lt.s32.totalorder %v502, 34
      %vm547 = vcmp.lt.s32.totalorder %v503, 34
      %vm548 = vcmp.lt.s32.totalorder %v504, 34
      %vm549 = vmand %vm537, %vm543
      %vm550 = vmand %vm538, %vm544
      %vm551 = vmand %vm539, %vm545
      %vm552 = vmand %vm540, %vm546
      %vm553 = vmand %vm541, %vm547
      %vm554 = vmand %vm542, %vm548
      %v555 = vsel %vm549, %v492, 0.0
      %v556 = vsel %vm550, %v493, 0.0
      %v557 = vsel %vm551, %v494, 0.0
      %v558 = vsel %vm552, %v495, 0.0
      %v559 = vsel %vm553, %v496, 0.0
      %v560 = vsel %vm554, %v497, 0.0
      %v561 = vsel %vm452, %v555, 0.0
      %v562 = vsel %vm452, %v556, 0.0
      %v563 = vadd.f32 %v561, %v562
      %v564 = vsel %vm452, %v557, 0.0
      %v565 = vadd.f32 %v563, %v564
      %v566 = vsel %vm452, %v558, 0.0
      %v567 = vadd.f32 %v565, %v566
      %v568 = vsel %vm452, %v559, 0.0
      %v569 = vadd.f32 %v567, %v568
      %v570 = vsel %vm452, %v560, 0.0
      %v571 = vadd.f32 %v569, %v570
      %572 = vadd.xlane.f32.xlu0 %v571
      %v573 = vpop.xlane.xlu0 %572
      %v574 = vrot.slane %v573, 4
      %v575 = vadd.f32 %v573, %v574
      %v576 = vrot.slane %v575, 2
      %v577 = vadd.f32 %v575, %v576
      %v578 = vrot.slane %v577, 1
      %v579 = vadd.f32 %v577, %v578
      %s580 = vtos %v579
      %v581 = vlaneseq
      %v582 = vand.u32 %v581, 127
      %vm583 = vcmp.eq.s32.totalorder %v582, 0
      %vm584 = vcmp.eq.s32.totalorder %v582, 1
      %v585 = vstv %s580
      %v586 = vsel %vm584, %v585, 0.0
      %v587 = vstv %s536
      %v588 = vsel %vm583, %v587, %v586
      %589 = vst [vmem:[#allocation11] sm:$0x1] %v588
    $region33: #{tpu_custom_call.1} parent=1 // pred_fallthru
      _
    // Predicated region
    $region34: #{tpu_custom_call.1} parent=1 // pred_check
      _
    $region35: #{tpu_custom_call.1} parent=1 // pred_check_branch
      %591 = sbr.rel (0) target = $region37
    $region36: #{tpu_custom_call.1} parent=1 // pred_region
      %s593 = ssub.s32 16, 16
      %594 = vsyncadd [#allocation7], %s593
      %s596 = sshll.u32 [#allocation11], 4
      %s597 = int_to_ptr.vmem [resolvable:$true] %s596
      %599 = dma.vmem_to_hbm [thread:$0]  %s597, 16, %s3, [#allocation7]
    $region37: #{tpu_custom_call.1} parent=1 // pred_fallthru
      _
    // Predicated region
    $region38: #{tpu_custom_call.1} parent=1 // pred_check
      _
    $region39: #{tpu_custom_call.1} parent=1 // pred_check_branch
      %601 = sbr.rel (0) target = $region41
    $region40: #{tpu_custom_call.1} parent=1 // pred_region
      %602 = dma.done [#allocation7], 16
    $region41: #{tpu_custom_call.1} parent=1 // pred_fallthru
      _
    %603 = vsyncpa [#allocation6], 1
    %604 = vsyncpa [#allocation9], 1
    %605 = vsyncpa [#allocation7], 1

</llo_original>
